<compile_context>
chip_gen: v7x
topology: tpu7x:2x2x1
jax: 0.10.0
libtpu: 0.0.40
codegen_flags: <defaults>
</compile_context>

<pallas_src>
import jax
import jax.numpy as jnp
from jax.experimental import pallas as pl
from jax.experimental.pallas import tpu as pltpu


def _conv_matmul_kernel(w_ref, p_ref, o_ref):
    # w_ref: (Cout_pad, K)       bf16 effective conv weight, K = 9*Cin
    # p_ref: (1, K, PX)          bf16 im2col patches for this (batch, band)
    # o_ref: (1, Cout_pad, PX)   f32, lane-dense output (PX multiple of 128 / full HW)
    o_ref[0] = jnp.dot(
        w_ref[...], p_ref[0], preferred_element_type=jnp.float32
    ).astype(o_ref.dtype)


def _pick_px_block(hw, k, cout_pad, budget_bytes=16 << 20):
    """Largest pixel band that keeps double-buffered VMEM use under budget."""
    # 2 pipeline buffers for the bf16 patch band + 2 for the f32 output band.
    per_px = 2 * (k * 2) + 2 * (cout_pad * 4)
    cap = max(128, budget_bytes // max(per_px, 1))
    if hw <= cap:
        return hw
    best = None
    b = 128
    while b <= min(hw, cap):
        if hw % b == 0:
            best = b
        b += 128
    return best if best is not None else hw


def _conv3x3_pallas(x_nchw, w_oihw, px_block=None):
    """3x3 conv, stride=1, padding=1, no bias: one MXU matmul per (batch, band).

    x_nchw: (N, Cin, H, W) f32; w_oihw: (Cout, Cin, 3, 3) f32.
    Returns (N, Cout, H, W) f32.
    """
    N, Cin, H, W = x_nchw.shape
    Cout = w_oihw.shape[0]
    HW = H * W
    K = 9 * Cin

    # Pad Cout to the 8-sublane tile so output stores are never partial-sublane.
    Cout_pad = ((Cout + 7) // 8) * 8

    if px_block is None:
        px_block = _pick_px_block(HW, K, Cout_pad)
    assert HW % px_block == 0 and (px_block == HW or px_block % 128 == 0)
    n_bands = HW // px_block

    # --- im2col built directly in (N, K, HW) order: no layout transposes. ---
    x_pad = jnp.pad(x_nchw, ((0, 0), (0, 0), (1, 1), (1, 1)))           # (N,Cin,H+2,W+2)
    taps = jnp.stack(
        [x_pad[:, :, ky:ky + H, kx:kx + W] for ky in range(3) for kx in range(3)],
        axis=2)                                                          # (N,Cin,9,H,W)
    patches = taps.reshape(N, K, HW).astype(jnp.bfloat16)                # (N,K,HW)

    # Flattened weight rows ordered (cin, ky, kx) -- matches the patch K order.
    w_mat = w_oihw.reshape(Cout, K)
    if Cout_pad != Cout:
        w_mat = jnp.pad(w_mat, ((0, Cout_pad - Cout), (0, 0)))
    w_mat = w_mat.astype(jnp.bfloat16)                                   # (Cout_pad,K)

    out_bytes = N * Cout_pad * HW * 4
    cost = pl.CostEstimate(
        flops=2 * N * Cout_pad * K * HW,
        transcendentals=0,
        bytes_accessed=patches.size * 2 + w_mat.size * 2 + out_bytes,
    )

    out = pl.pallas_call(
        _conv_matmul_kernel,
        out_shape=jax.ShapeDtypeStruct((N, Cout_pad, HW), jnp.float32),
        grid=(N, n_bands),
        in_specs=[
            pl.BlockSpec((Cout_pad, K), lambda n, r: (0, 0)),
            pl.BlockSpec((1, K, px_block), lambda n, r: (n, 0, r)),
        ],
        out_specs=pl.BlockSpec((1, Cout_pad, px_block), lambda n, r: (n, 0, r)),
        compiler_params=pltpu.CompilerParams(
            dimension_semantics=("parallel", "parallel")),
        cost_estimate=cost,
    )(w_mat, patches)

    out = out[:, :Cout, :].reshape(N, Cout, H, W)
    return out


def conv_bn_relu_forward(x_nchw, w_qconv_oihw):
    """ConvBNReLU.forward with norm_layer=None: quaternion 3x3 conv -> identity."""
    return _conv3x3_pallas(x_nchw, w_qconv_oihw)


def make_quaternion_conv_weight(key, in_chan, out_chan, ks):
    """Effective OIHW weight of a QuaternionConv (Hamilton-product block structure)."""
    assert in_chan % 4 == 0 and out_chan % 4 == 0
    ci, co = in_chan // 4, out_chan // 4
    kr, ki, kj, kk = jax.random.split(key, 4)
    shape = (co, ci, ks, ks)
    scale = 0.1
    r = scale * jax.random.normal(kr, shape, jnp.float32)
    i = scale * jax.random.normal(ki, shape, jnp.float32)
    j = scale * jax.random.normal(kj, shape, jnp.float32)
    k = scale * jax.random.normal(kk, shape, jnp.float32)
    row_r = jnp.concatenate([r, -i, -j, -k], axis=1)
    row_i = jnp.concatenate([i,  r, -k,  j], axis=1)
    row_j = jnp.concatenate([j,  k,  r, -i], axis=1)
    row_k = jnp.concatenate([k, -j,  i,  r], axis=1)
    return jnp.concatenate([row_r, row_i, row_j, row_k], axis=0)  # (out, in, ks, ks)


if __name__ == "__main__":
    # ConvBNReLU(in_chan=8, out_chan=8), input (N=2, Cin=8, H=W=16)
    N, Cin, Cout, H, W = 2, 8, 8, 16, 16
    key = jax.random.PRNGKey(0)
    kx, kq = jax.random.split(key, 2)

    x = jax.random.normal(kx, (N, Cin, H, W), jnp.float32)
    w_qconv = make_quaternion_conv_weight(kq, Cin, Cout, 3)        # (Cout, Cin, 3, 3)

    out = jax.block_until_ready(conv_bn_relu_forward(x, w_qconv))

    # Reference: XLA conv with the same semantics as the PyTorch forward (f32).
    ref = jax.lax.conv_general_dilated(
        x, w_qconv, (1, 1), ((1, 1), (1, 1)),
        dimension_numbers=("NCHW", "OIHW", "NCHW"))
    assert out.shape == (N, Cout, H, W)
    # Tolerance relaxed because the matmul inputs are bf16 (f32 accumulation).
    assert jnp.allclose(out, ref, atol=5e-2, rtol=5e-2), (
        float(jnp.max(jnp.abs(out - ref))))

    print("KERNEL_OK")
</pallas_src>

<mosaic_0001>
module attributes {stable_mosaic.version = 11 : i64} {
  func.func @_conv_matmul_kernel(%arg0: i32, %arg1: i32, %arg2: memref<8x72xbf16, #tpu.memory_space<vmem>>, %arg3: memref<1x72x256xbf16, #tpu.memory_space<vmem>>, %arg4: memref<1x8x256xf32, #tpu.memory_space<vmem>>) attributes {dimension_semantics = [#tpu.dimension_semantics<parallel>, #tpu.dimension_semantics<parallel>], iteration_bounds = array<i64: 2, 1>, scalar_prefetch = 0 : i64, scratch_operands = 0 : i64, tpu.core_type = #tpu.core_type<tc>, window_params = [{pipeline_mode = #tpu.pipeline_mode<synchronous>, transform_indices = @transform_0, window_bounds = array<i64: 8, 72>}, {transform_indices = @transform_1, window_bounds = array<i64: 1, 72, 256>}, {transform_indices = @transform_2, window_bounds = array<i64: 1, 8, 256>}]} {
    %c0 = arith.constant 0 : index
    %c0_0 = arith.constant 0 : index
    %0 = vector.load %arg2[%c0, %c0_0] : memref<8x72xbf16, #tpu.memory_space<vmem>>, vector<8x72xbf16>
    %c0_1 = arith.constant 0 : index
    %c0_2 = arith.constant 0 : index
    %c0_3 = arith.constant 0 : index
    %1 = vector.load %arg3[%c0_1, %c0_2, %c0_3] : memref<1x72x256xbf16, #tpu.memory_space<vmem>>, vector<1x72x256xbf16>
    %2 = vector.shape_cast %1 : vector<1x72x256xbf16> to vector<72x256xbf16>
    %cst = arith.constant dense<0.000000e+00> : vector<8x256xf32>
    %3 = tpu.matmul %0, %2, %cst {dimension_numbers = #tpu.dot_dimension_numbers<[1], [0], [0], [1], [0, 0, 1, 1], [], []>} : vector<8x72xbf16>, vector<72x256xbf16>, vector<8x256xf32> -> vector<8x256xf32>
    %c0_4 = arith.constant 0 : index
    %c0_5 = arith.constant 0 : index
    %c0_6 = arith.constant 0 : index
    %4 = vector.load %arg4[%c0_4, %c0_5, %c0_6] : memref<1x8x256xf32, #tpu.memory_space<vmem>>, vector<1x8x256xf32>
    %5 = vector.shape_cast %4 : vector<1x8x256xf32> to vector<8x256xf32>
    %6 = vector.shape_cast %3 : vector<8x256xf32> to vector<1x8x256xf32>
    tpu.vector_store %arg4[%c0_4, %c0_5, %c0_6], %6 {strides = array<i32>} : memref<1x8x256xf32, #tpu.memory_space<vmem>>, vector<1x8x256xf32>,
    return
  }
  func.func @transform_0(%arg0: i32, %arg1: i32) -> (i32, i32) {
    %c0_i32 = arith.constant 0 : i32
    %c0_i32_0 = arith.constant 0 : i32
    %c0_i32_1 = arith.constant 0 : i32
    return %c0_i32, %c0_i32_0 : i32, i32
  }
  func.func @transform_1(%arg0: i32, %arg1: i32) -> (i32, i32, i32) {
    %c0_i32 = arith.constant 0 : i32
    %c0_i32_0 = arith.constant 0 : i32
    return %arg0, %c0_i32, %arg1 : i32, i32, i32
  }
  func.func @transform_2(%arg0: i32, %arg1: i32) -> (i32, i32, i32) {
    %c0_i32 = arith.constant 0 : i32
    %c0_i32_0 = arith.constant 0 : i32
    return %arg0, %c0_i32, %arg1 : i32, i32, i32
  }
}

</mosaic_0001>

<llo_original>
// kernel: tpu_custom_call.1
$region0: #{tpu_custom_call.1}
  #allocation0 [shape = 'u32[]', space=smem, size = 0x4, offset = 0x4, fixed_abs, tag = 'smem constant byte address 0x4 - core index']
  #allocation1 [shape = 'u32[144,128]{1,0:T(1,128)}', space=vmem, size = 0x12000, scoped, tag = 'internal scratch']
  %s0 = inlined_call_operand.hbm [shape: bf16[8,72], index: 0, kind: input, shape index: {}]
  %s1 = inlined_call_operand.hbm [shape: bf16[2,72,256], index: 1, kind: input, shape index: {}]
  %s2 = inlined_call_operand.hbm [shape: f32[2,8,256], index: 2, kind: output, shape index: {}]
  %s3 = sld [smem:[#allocation0]]
  $region49: #{tpu_custom_call.1} parent=0
    _
  %s5 = ssub.s32 1, %s3
  %s6 = scalar_select 0, %s5, %s3
  $region1: #{tpu_custom_call.1} parent=0
    #allocation2 [shape = 'u8[2048]{0}', space=vmem, size = 0x800, scoped, tag = 'input window, operand 0, single buffered']
    #allocation3 [shape = 's32[2]{0}', space=sflag, size = 0x8, scoped, tag = 'scoped memory for tpu_custom_call.1']
    #allocation4 [shape = 's32[2]{0}', space=sflag, size = 0x8, scoped, tag = 'scoped memory for tpu_custom_call.1']
    #allocation5 [shape = 'u8[73728]{0}', space=vmem, size = 0x12000, scoped, tag = 'input window, operand 1']
    #allocation6 [shape = 's32[2]{0}', space=sflag, size = 0x8, scoped, tag = 'scoped memory for tpu_custom_call.1']
    #allocation7 [shape = 'u8[16384]{0}', space=vmem, size = 0x4000, scoped, tag = 'output window, operand 0']
    %7 = vsyncpa [#allocation3], 0
    %8 = vsyncpa [#allocation6], 0
    %s9 = scalar_lea.sflag [#allocation6], 1
    %10 = vsyncpa %s9, 0
    %11 = vsyncpa [#allocation4], 0
    %s12 = scalar_lea.sflag [#allocation4], 1
    %13 = vsyncpa %s12, 0
    loop: start=0, step=1, limit=4
    $region2: #{tpu_custom_call.1} parent=1 // loop_pre_header
      _
    $region3: #{tpu_custom_call.1} parent=1 // loop_header
      %s15 = sphi 0, %s19
      %p16 = scmp.ge.s32.totalorder %s15, 4
      %s22 = sphi 0, %s34
      %s23 = sphi 0, %s30
      %s24 = sphi 0, %s22
      %s25 = sphi 0, %s23
      %s26 = sphi 0, %s24
      %s27 = sphi 0, %s25
      %s35 = sphi 0, %s35
      %s37 = sphi 0, %s35
      %s38 = sphi 0, %s37
      %s52 = sphi 0, %s38
      %s60 = sphi 0, %s62
      %s63 = sphi 0, %s60
      %s64 = sphi 0, %s63
      %s80 = sphi 0, %s64
      %s88 = sphi 0, %s90
      %s91 = sphi 0, %s88
      %s92 = sphi 0, %s91
      %s108 = sphi 0, %s92
    $region4: #{tpu_custom_call.1} parent=1 // loop_header_branch
      %18 = sbr.rel (%p16) target = $region8
    $region5: #{tpu_custom_call.1} parent=1 // loop_body
      %s20 = ssub.s32 %s15, 1
      %s21 = ssub.s32 %s15, 2
      %s28 = sadd.s32 1, %s23
      %p29 = scmp.ge.s32.totalorder %s28, 1
      %s30 = scalar_select %p29, 0, %s28
      %s31 = sadd.s32 1, %s22
      %s32 = scalar_select %p29, %s31, %s22
      %p33 = scmp.ge.s32.totalorder %s32, 2
      %s34 = scalar_select %p33, 0, %s32
      %s36 = sadd.s32 %s35, 1
      %p39 = scmp.eq.s32.totalorder %s15, 1
      %p40 = scmp.ne.s32.totalorder %s35, %s37
      %p41 = scmp.eq.s32.totalorder %s15, 0
      %p42 = por %p40, %p41
      %p43 = scmp.ne.s32.totalorder %s35, %s37
      %p44 = scmp.eq.s32.totalorder %s20, 1
      %p45 = por %p43, %p44
      %p46 = scmp.ne.s32.totalorder %s37, %s38
      %p47 = scmp.eq.s32.totalorder %s20, 0
      %p48 = por %p46, %p47
      %p49 = scmp.ne.s32.totalorder %s37, %s38
      %p50 = scmp.eq.s32.totalorder %s21, 1
      %p51 = por %p49, %p50
      %p53 = scmp.ne.s32.totalorder %s38, %s52
      %p54 = scmp.eq.s32.totalorder %s21, 0
      %p55 = por %p53, %p54
      %s56 = ssub.s32 %s22, %s34
      %s57 = ssub.s32 %s23, %s30
      %s58 = sor.u32 %s56, %s57
      %p59 = scmp.eq.s32.totalorder %s58, 0
      %s61 = sadd.s32 %s60, 1
      %s62 = scalar_select %p59, %s60, %s61
      %p65 = pneg %p59
      %p66 = scmp.eq.s32.totalorder %s15, 1
      %p67 = por %p65, %p66
      %p68 = scmp.ne.s32.totalorder %s60, %s63
      %p69 = scmp.eq.s32.totalorder %s15, 0
      %p70 = por %p68, %p69
      %p71 = scmp.ne.s32.totalorder %s60, %s63
      %p72 = scmp.eq.s32.totalorder %s20, 1
      %p73 = por %p71, %p72
      %p74 = scmp.ne.s32.totalorder %s63, %s64
      %p75 = scmp.eq.s32.totalorder %s20, 0
      %p76 = por %p74, %p75
      %p77 = scmp.ne.s32.totalorder %s63, %s64
      %p78 = scmp.eq.s32.totalorder %s21, 1
      %p79 = por %p77, %p78
      %p81 = scmp.ne.s32.totalorder %s64, %s80
      %p82 = scmp.eq.s32.totalorder %s21, 0
      %p83 = por %p81, %p82
      %s84 = ssub.s32 %s22, %s34
      %s85 = ssub.s32 %s23, %s30
      %s86 = sor.u32 %s84, %s85
      %p87 = scmp.eq.s32.totalorder %s86, 0
      %s89 = sadd.s32 %s88, 1
      %s90 = scalar_select %p87, %s88, %s89
      %p93 = pneg %p87
      %p94 = scmp.eq.s32.totalorder %s15, 1
      %p95 = por %p93, %p94
      %p96 = scmp.ne.s32.totalorder %s88, %s91
      %p97 = scmp.eq.s32.totalorder %s15, 0
      %p98 = por %p96, %p97
      %p99 = scmp.ne.s32.totalorder %s88, %s91
      %p100 = scmp.eq.s32.totalorder %s20, 1
      %p101 = por %p99, %p100
      %p102 = scmp.ne.s32.totalorder %s91, %s92
      %p103 = scmp.eq.s32.totalorder %s20, 0
      %p104 = por %p102, %p103
      %p105 = scmp.ne.s32.totalorder %s91, %s92
      %p106 = scmp.eq.s32.totalorder %s21, 1
      %p107 = por %p105, %p106
      %p109 = scmp.ne.s32.totalorder %s92, %s108
      %p110 = scmp.eq.s32.totalorder %s21, 0
      %p111 = por %p109, %p110
      %p112 = scmp.le.s32.totalorder 1, %s15
      %p113 = scmp.lt.s32.totalorder %s15, 3
      %p114 = pnand %p112, %p113
      %p115 = pneg %p114
      // Predicated region
      $region9: #{tpu_custom_call.1} parent=5 // pred_check
        _
      $region10: #{tpu_custom_call.1} parent=5 // pred_check_branch
        %117 = sbr.rel (%p114) target = $region12
      $region11: #{tpu_custom_call.1} parent=5 // pred_region
        %s118 = ssub.s32 %s15, 1
        // Predicated region
        $region13: #{tpu_custom_call.1} parent=11 // pred_check
          %p119 = pneg %p48
        $region14: #{tpu_custom_call.1} parent=11 // pred_check_branch
          %121 = sbr.rel (%p119) target = $region16
        $region15: #{tpu_custom_call.1} parent=11 // pred_region
          %s123 = ssub.s32 64, 64
          %124 = vsyncadd [#allocation3], %s123
          %s126 = sshll.u32 [#allocation2], 4
          %s127 = int_to_ptr.vmem [resolvable:$true] %s126
          %129 = dma.hbm_to_vmem [thread:$0]  %s0, 64, %s127, [#allocation3]
        $region16: #{tpu_custom_call.1} parent=11 // pred_fallthru
          _
      $region12: #{tpu_custom_call.1} parent=5 // pred_fallthru
        _
      %p130 = scmp.lt.s32.totalorder %s15, 2
      // Predicated region
      $region17: #{tpu_custom_call.1} parent=5 // pred_check
        %p131 = pneg %p130
      $region18: #{tpu_custom_call.1} parent=5 // pred_check_branch
        %133 = sbr.rel (%p131) target = $region20
      $region19: #{tpu_custom_call.1} parent=5 // pred_region
        // Predicated region
        $region21: #{tpu_custom_call.1} parent=19 // pred_check
          %p134 = pneg %p70
        $region22: #{tpu_custom_call.1} parent=19 // pred_check_branch
          %136 = sbr.rel (%p134) target = $region24
        $region23: #{tpu_custom_call.1} parent=19 // pred_region
          %s137 = sand.u32 %s60, 1
          %s138 = scalar_lea.sflag [#allocation6], %s137
          %s139 = sand.u32 %s60, 1
          %s140 = smul.addr %s139, 72
          %s141 = scalar_lea.vmem [#allocation5], %s140
          %s142 = smul.u32 2, %s23
          %s144 = ssub.s32 1152, 1152
          %145 = vsyncadd %s138, %s144
          %s146 = smul.addr %s22, 18
          %s147 = sadd.s32 %s142, %s146
          %s148 = smul.addr %s147, 64
          %s149 = scalar_lea.hbm %s1, %s148
          %s150 = sshll.u32 %s141, 4
          %s151 = int_to_ptr.vmem [resolvable:$true] %s150
          %156 = dma.hbm_to_vmem [thread:$0]  %s149, 1152, %s151, %s138, 128, 128, 8
        $region24: #{tpu_custom_call.1} parent=19 // pred_fallthru
          _
      $region20: #{tpu_custom_call.1} parent=5 // pred_fallthru
        _
      %p157 = scmp.le.s32.totalorder 1, %s15
      %p158 = scmp.lt.s32.totalorder %s15, 3
      %p159 = pnand %p157, %p158
      %p160 = pneg %p159
      // Predicated region
      $region25: #{tpu_custom_call.1} parent=5 // pred_check
        _
      $region26: #{tpu_custom_call.1} parent=5 // pred_check_branch
        %162 = sbr.rel (%p159) target = $region28
      $region27: #{tpu_custom_call.1} parent=5 // pred_region
        %s163 = ssub.s32 %s15, 1
        // Predicated region
        $region29: #{tpu_custom_call.1} parent=27 // pred_check
          %p164 = pneg %p48
        $region30: #{tpu_custom_call.1} parent=27 // pred_check_branch
          %166 = sbr.rel (%p164) target = $region32
        $region31: #{tpu_custom_call.1} parent=27 // pred_region
          %167 = dma.done [#allocation3], 64
        $region32: #{tpu_custom_call.1} parent=27 // pred_fallthru
          _
        %s168 = sand.u32 %s63, 1
        %s169 = scalar_lea.sflag [#allocation6], %s168
        %s170 = sand.u32 %s63, 1
        %s171 = smul.addr %s170, 72
        %s172 = scalar_lea.vmem [#allocation5], %s171
        // Predicated region
        $region33: #{tpu_custom_call.1} parent=27 // pred_check
          %p173 = pneg %p76
        $region34: #{tpu_custom_call.1} parent=27 // pred_check_branch
          %175 = sbr.rel (%p173) target = $region36
        $region35: #{tpu_custom_call.1} parent=27 // pred_region
          %176 = dma.done %s169, 1152
        $region36: #{tpu_custom_call.1} parent=27 // pred_fallthru
          _
        %p177 = pneg %p48
        %p178 = pneg %p45
        %s179 = sand.u32 %s63, 1
        %s180 = scalar_lea.sflag [#allocation6], %s179
        %s181 = sand.u32 %s63, 1
        %s182 = smul.addr %s181, 72
        %s183 = scalar_lea.vmem [#allocation5], %s182
        %p184 = pneg %p76
        %p185 = pneg %p73
        %p186 = pneg %p104
        %p187 = pneg %p101
        %s188 = sand.u32 %s91, 1
        %s189 = scalar_lea.sflag [#allocation4], %s188
        %s190 = sand.u32 %s91, 1
        %s191 = smul.addr %s190, 16
        %s192 = scalar_lea.vmem [#allocation7], %s191
        %s193 = smul.u32 2, %s25
        %s194 = smul.u32 2, %s25
        %v196 = vld [vmem:[#allocation2] sm:$0xf]
        %v197 = vld [vmem:[%s172] sm:$0xff]
        %v198 = vld [vmem:[%s172 + $0x8] sm:$0xff]
        %v199 = vld [vmem:[%s172 + $0x10] sm:$0xff]
        %v200 = vld [vmem:[%s172 + $0x18] sm:$0xff]
        %v201 = vld [vmem:[%s172 + $0x20] sm:$0xff]
        %v202 = vld [vmem:[%s172 + $0x28] sm:$0xff]
        %v203 = vld [vmem:[%s172 + $0x30] sm:$0xff]
        %v204 = vld [vmem:[%s172 + $0x38] sm:$0xff]
        %v205 = vld [vmem:[%s172 + $0x40] sm:$0xff]
        %v215 = vunpack.c.l.b16 %v197
        %v216 = vunpack.c.h.b16 %v197
        %v217 = vunpack.c.l.b16 %v198
        %v218 = vunpack.c.h.b16 %v198
        %v219 = vunpack.c.l.b16 %v199
        %v220 = vunpack.c.h.b16 %v199
        %v221 = vunpack.c.l.b16 %v200
        %v222 = vunpack.c.h.b16 %v200
        %v223 = vunpack.c.l.b16 %v201
        %v224 = vunpack.c.h.b16 %v201
        %v225 = vunpack.c.l.b16 %v202
        %v226 = vunpack.c.h.b16 %v202
        %v227 = vunpack.c.l.b16 %v203
        %v228 = vunpack.c.h.b16 %v203
        %v229 = vunpack.c.l.b16 %v204
        %v230 = vunpack.c.h.b16 %v204
        %v231 = vunpack.c.l.b16 %v205
        %v232 = vunpack.c.h.b16 %v205
        %v233 = vpack.c.b16 %v217, %v215
        %v234 = vpack.c.b16 %v218, %v216
        %v235 = vpack.c.b16 %v221, %v219
        %v236 = vpack.c.b16 %v222, %v220
        %v237 = vpack.c.b16 %v225, %v223
        %v238 = vpack.c.b16 %v226, %v224
        %v239 = vpack.c.b16 %v229, %v227
        %v240 = vpack.c.b16 %v230, %v228
        %v241 = vpack.c.b16 %v231, %v231
        %v242 = vpack.c.b16 %v232, %v232
        %vm251 = vcmask 588800
        %v253 = vsel %vm251, %v196, 0
        %vm255 = vcmask 1043456
        %v257 = vsel %vm255, %v241, 0
        %v260 = vsel %vm255, %v242, 0
        %262 = vmatprep.subr.bf16.mxu0 %v234
        %263 = vmatpush1.bf16.msra.mxu0 %v233
        %264 = vmatprep.subr.bf16.mxu0 %v236
        %265 = vmatpush1.bf16.msra.mxu0 %v235
        %266 = vmatprep.subr.bf16.mxu0 %v238
        %267 = vmatpush1.bf16.msra.mxu0 %v237
        %268 = vmatprep.subr.bf16.mxu0 %v240
        %269 = vmatpush1.bf16.msra.mxu0 %v239
        %270 = vmatprep.subr.bf16.mxu0 %v260
        %271 = vmatpush1.bf16.msra.mxu0 %v257
        %272 = vmatprep.subr.bf16.mxu0 0
        %273 = vmatpush1.bf16.msra.mxu0 0
        %274 = vmatprep.subr.bf16.mxu0 0
        %275 = vmatpush1.bf16.msra.mxu0 0
        %276 = vmatprep.subr.bf16.mxu0 0
        %277 = vmatpush1.bf16.msra.mxu0 0
        %278 = vmatprep.subr.bf16.mxu0 0
        %279 = vmatpush1.bf16.msra.mxu0 0
        %280 = vmatprep.subr.bf16.mxu0 0
        %281 = vmatpush1.bf16.msra.mxu0 0
        %282 = vmatprep.subr.bf16.mxu0 0
        %283 = vmatpush1.bf16.msra.mxu0 0
        %284 = vmatprep.subr.bf16.mxu0 0
        %285 = vmatpush1.bf16.msra.mxu0 0
        %286 = vmatprep.subr.bf16.mxu0 0
        %287 = vmatpush1.bf16.msra.mxu0 0
        %288 = vmatprep.subr.bf16.mxu0 0
        %289 = vmatpush1.bf16.msra.mxu0 0
        %290 = vmatprep.subr.bf16.mxu0 0
        %291 = vmatpush1.bf16.msra.mxu0 0
        %292 = vmatprep.subr.bf16.mxu0 0
        %293 = vmatpush1.bf16.msra.mxu0 0
        %294 = vmatprep.mubr.bf16.mxu0 0
        %295 = vmatmul.mubr.bf16.gmra.mrb[0].mxu0 %v253
        %v296 = vpop.f32.mrb[0].mxu0
        %v297 = vadd.f32 0.0, %v296
        %v298 = vpop.f32.mrb[0].mxu0
        %v299 = vadd.f32 0.0, %v298
        %v300 = vpop.f32.mrb[0].mxu0
        %v301 = vpop.f32.mrb[0].mxu0
        %302 = vdwg.mxu0
        %303 = vst [vmem:[%s192] sm:$0xff] %v297
        %304 = vst [vmem:[%s192 + $0x8] sm:$0xff] %v299
        %s305 = sand.u32 %s91, 1
        %s306 = scalar_lea.sflag [#allocation4], %s305
        %s307 = sand.u32 %s91, 1
        %s308 = smul.addr %s307, 16
        %s309 = scalar_lea.vmem [#allocation7], %s308
        // Predicated region
        $region37: #{tpu_custom_call.1} parent=27 // pred_check
          %p310 = pneg %p101
        $region38: #{tpu_custom_call.1} parent=27 // pred_check_branch
          %312 = sbr.rel (%p310) target = $region40
        $region39: #{tpu_custom_call.1} parent=27 // pred_region
          %s313 = smul.u32 2, %s25
          %s315 = ssub.s32 256, 256
          %316 = vsyncadd %s306, %s315
          %s317 = smul.addr %s24, 2
          %s318 = sadd.s32 %s313, %s317
          %s319 = smul.addr %s318, 128
          %s320 = scalar_lea.hbm %s2, %s319
          %s322 = sshll.u32 %s309, 4
          %s323 = int_to_ptr.vmem [resolvable:$true] %s322
          %325 = dma.vmem_to_hbm [thread:$0]  %s323, 256, %s320, %s306
        $region40: #{tpu_custom_call.1} parent=27 // pred_fallthru
          _
      $region28: #{tpu_custom_call.1} parent=5 // pred_fallthru
        _
      %p326 = scmp.le.s32.totalorder 2, %s15
      // Predicated region
      $region41: #{tpu_custom_call.1} parent=5 // pred_check
        %p327 = pneg %p326
      $region42: #{tpu_custom_call.1} parent=5 // pred_check_branch
        %329 = sbr.rel (%p327) target = $region44
      $region43: #{tpu_custom_call.1} parent=5 // pred_region
        %s330 = ssub.s32 %s15, 2
        // Predicated region
        $region45: #{tpu_custom_call.1} parent=43 // pred_check
          %p331 = pneg %p107
        $region46: #{tpu_custom_call.1} parent=43 // pred_check_branch
          %333 = sbr.rel (%p331) target = $region48
        $region47: #{tpu_custom_call.1} parent=43 // pred_region
          %s334 = sand.u32 %s92, 1
          %s335 = scalar_lea.sflag [#allocation4], %s334
          %s336 = sand.u32 %s92, 1
          %s337 = smul.addr %s336, 16
          %s338 = scalar_lea.vmem [#allocation7], %s337
          %339 = dma.done %s335, 256
        $region48: #{tpu_custom_call.1} parent=43 // pred_fallthru
          _
      $region44: #{tpu_custom_call.1} parent=5 // pred_fallthru
        _
    $region6: #{tpu_custom_call.1} parent=1 // loop_footer
      %s19 = sadd.s32 1, %s15
    $region7: #{tpu_custom_call.1} parent=1 // loop_footer_branch
      %14 = sbr.rel target = $region3
    $region8: #{tpu_custom_call.1} parent=1 // loop_exit
      _
    %340 = vsyncpa [#allocation3], 1
    %s341 = scalar_lea.sflag [#allocation3], 1
    %342 = vsyncpa %s341, 1
    %343 = vsyncpa [#allocation6], 1
    %s344 = scalar_lea.sflag [#allocation6], 1
    %345 = vsyncpa %s344, 1
    %346 = vsyncpa [#allocation4], 1
    %s347 = scalar_lea.sflag [#allocation4], 1
    %348 = vsyncpa %s347, 1

</llo_original>
